<compile_context>
chip_gen: v6e
topology: v6e:2x2x1
jax: 0.10.0
libtpu: 0.0.40
codegen_flags: <defaults>
</compile_context>

<pallas_src>
from functools import partial

import jax
import jax.numpy as jnp
from jax.experimental import pallas as pl
from jax.experimental.pallas import tpu as pltpu

F_u = 10
F_xs = 10
F_xt = 2

# pooled-slab row layout (sublanes): [ sum_s (10) | cnt_s (1) | sum_t (2) | cnt_t (1) ]
F_TOT = F_xs + 1 + F_xt + 1  # 14


def _global_model_kernel(bidx_ref, slab_ref, u_ref,
                         w1u_ref, w1s_ref, w1t_ref, b1_ref, w2_ref, b2_ref,
                         out_ref, acc_ref):
    k = pl.program_id(0)
    B = u_ref.shape[0]
    tile_n = slab_ref.shape[1]

    @pl.when(k == 0)
    def _():
        acc_ref[...] = jnp.zeros_like(acc_ref)

    # ---- pooled scatter-sum for this N-tile --------------------------------
    # one-hot[b, n] = (batch[n] == b); exact in bf16 and f32.
    slab = slab_ref[...]                                           # [F_TOT, tile_n]
    gids = jax.lax.broadcasted_iota(jnp.int32, (B, tile_n), 0)
    onehot = (gids == bidx_ref[...]).astype(slab.dtype)            # [B, tile_n]
    # Single MXU contraction over the node axis (rhs-transposed dot):
    #   [B, tile_n] x [F_TOT, tile_n]^T -> [B, F_TOT], accumulated in f32.
    acc_ref[...] += jax.lax.dot_general(
        onehot, slab,
        dimension_numbers=(((1,), (1,)), ((), ())),
        preferred_element_type=jnp.float32)

    # ---- finalize: means + global MLP on the last tile ----------------------
    @pl.when(k == pl.num_programs(0) - 1)
    def _():
        pooled = acc_ref[...]                                      # [B, F_TOT]
        sum_s = pooled[:, 0:F_xs]
        cnt_s = pooled[:, F_xs:F_xs + 1]
        sum_t = pooled[:, F_xs + 1:F_xs + 1 + F_xt]
        cnt_t = pooled[:, F_xs + 1 + F_xt:F_TOT]
        s_mean = sum_s / jnp.maximum(cnt_s, 1.0)                   # scatter_mean clamp
        t_mean = sum_t / jnp.maximum(cnt_t, 1.0)

        # Linear(22 -> 10) as split matmuls (== concat([u, s, t]) @ W1 + b1)
        h1 = (jnp.dot(u_ref[...], w1u_ref[...], preferred_element_type=jnp.float32)
              + jnp.dot(s_mean, w1s_ref[...], preferred_element_type=jnp.float32)
              + jnp.dot(t_mean, w1t_ref[...], preferred_element_type=jnp.float32)
              + b1_ref[...])
        h1 = jnp.where(h1 > 0, h1, 0.1 * h1)                       # LeakyReLU(0.1)
        out = jnp.dot(h1, w2_ref[...],
                      preferred_element_type=jnp.float32) + b2_ref[...]
        out_ref[...] = out.astype(out_ref.dtype)


@partial(jax.jit, static_argnames=("tile_n", "pool_in_f32"))
def global_model_forward(x_s, x_t, edge_index, edge_attr, u, batch_s, batch_t,
                         params, tile_n=2048, pool_in_f32=False):
    """Pallas-backed GlobalModel.forward (edge_index / edge_attr are unused,
    matching the PyTorch module).

    tile_n: nodes per grid step (multiple of 256; 128-multiples suffice on v5e).
    pool_in_f32: stream the pooling slab in f32 instead of bf16 (tighter
      pooled-mean precision at 2x slab DMA bytes).
    """
    del edge_index, edge_attr
    B = u.shape[0]
    N_s, N_t = x_s.shape[0], x_t.shape[0]
    N = N_s + N_t
    num_tiles = pl.cdiv(N, tile_n)
    N_pad = num_tiles * tile_n
    slab_dtype = jnp.float32 if pool_in_f32 else jnp.bfloat16

    # ---- lane-major block-diagonal [x | 1] slab: [F_TOT, N_pad] -------------
    #   rows  0:10  = x_s^T          (cols 0:N_s)
    #   row   10    = ones (cnt_s)   (cols 0:N_s)
    #   rows 11:13  = x_t^T          (cols N_s:N)
    #   row   13    = ones (cnt_t)   (cols N_s:N)
    # TODO(synk): emit this layout directly from the producing kernel to kill
    # the staging round trip (see header note).
    slab = jnp.zeros((F_TOT, N_pad), jnp.float32)
    slab = slab.at[0:F_xs, :N_s].set(x_s.T)
    slab = slab.at[F_xs, :N_s].set(1.0)
    slab = slab.at[F_xs + 1:F_xs + 1 + F_xt, N_s:N].set(x_t.T)
    slab = slab.at[F_xs + 1 + F_xt, N_s:N].set(1.0)
    slab = slab.astype(slab_dtype)

    # ---- batch indices, lane-major [1, N_pad]; padding cols -> index B ------
    # (any real index >= B or < 0 is dropped, matching segment_sum semantics)
    bidx = jnp.full((1, N_pad), B, jnp.int32)
    bidx = bidx.at[0, :N_s].set(batch_s.astype(jnp.int32))
    bidx = bidx.at[0, N_s:N].set(batch_t.astype(jnp.int32))

    # ---- pre-split W1 so the kernel never slices across sublane tiles -------
    w1 = params["w1"]
    w1_u = w1[0:F_u, :]
    w1_s = w1[F_u:F_u + F_xs, :]
    w1_t = w1[F_u + F_xs:, :]
    b1, w2, b2 = params["b1"], params["w2"], params["b2"]

    const = lambda shp: pl.BlockSpec(shp, lambda k: (0, 0))  # grid-resident

    grid_spec = pltpu.PrefetchScalarGridSpec(
        num_scalar_prefetch=0,
        grid=(num_tiles,),                                     # reduction over N tiles
        in_specs=[
            pl.BlockSpec((1, tile_n), lambda k: (0, k)),       # batch indices
            pl.BlockSpec((F_TOT, tile_n), lambda k: (0, k)),   # lane-major x slab
            const((B, F_u)),                                   # u
            const((F_u, F_u)),                                 # W1[:10]
            const((F_xs, F_u)),                                # W1[10:20]
            const((F_xt, F_u)),                                # W1[20:22]
            const((1, F_u)),                                   # b1
            const((F_u, F_u)),                                 # W2
            const((1, F_u)),                                   # b2
        ],
        out_specs=pl.BlockSpec((B, F_u), lambda k: (0, 0)),
        scratch_shapes=[pltpu.VMEM((B, F_TOT), jnp.float32)],
    )

    return pl.pallas_call(
        _global_model_kernel,
        out_shape=jax.ShapeDtypeStruct((B, F_u), jnp.float32),
        grid_spec=grid_spec,
        compiler_params=pltpu.CompilerParams(
            # N axis is a reduction into the scratch accumulator.
            dimension_semantics=("arbitrary",),
        ),
    )(bidx, slab, u, w1_u, w1_s, w1_t, b1, w2, b2)


def init_params(key):
    """Deterministic init mirroring torch.nn.Linear default (U[-1/sqrt(fan_in), ..])."""
    k1, k2, k3, k4 = jax.random.split(key, 4)
    fan1 = F_u + F_xs + F_xt
    lim1 = 1.0 / jnp.sqrt(fan1)
    lim2 = 1.0 / jnp.sqrt(F_u)
    return {
        # stored as [in_features, out_features] so forward is x @ W + b
        "w1": jax.random.uniform(k1, (fan1, F_u), jnp.float32, -lim1, lim1),
        "b1": jax.random.uniform(k2, (1, F_u), jnp.float32, -lim1, lim1),
        "w2": jax.random.uniform(k3, (F_u, F_u), jnp.float32, -lim2, lim2),
        "b2": jax.random.uniform(k4, (1, F_u), jnp.float32, -lim2, lim2),
    }


def reference_forward(x_s, x_t, u, batch_s, batch_t, params):
    """Pure-JAX (f32) reference for correctness checking."""
    B = u.shape[0]
    sum_s = jax.ops.segment_sum(x_s, batch_s, num_segments=B)
    cnt_s = jax.ops.segment_sum(jnp.ones((x_s.shape[0],)), batch_s, num_segments=B)
    s_mean = sum_s / jnp.maximum(cnt_s, 1.0)[:, None]
    sum_t = jax.ops.segment_sum(x_t, batch_t, num_segments=B)
    cnt_t = jax.ops.segment_sum(jnp.ones((x_t.shape[0],)), batch_t, num_segments=B)
    t_mean = sum_t / jnp.maximum(cnt_t, 1.0)[:, None]
    h = jnp.concatenate([u, s_mean, t_mean], axis=1)
    h1 = h @ params["w1"] + params["b1"]
    h1 = jnp.where(h1 > 0, h1, 0.1 * h1)
    return h1 @ params["w2"] + params["b2"]


if __name__ == "__main__":
    key = jax.random.PRNGKey(0)
    kp, kxs, kxt, ku, ke = jax.random.split(key, 5)

    # Small-but-multi-tile shapes: N = 320 nodes with tile_n=256 -> 2 grid steps,
    # exercising the cross-tile accumulator path.
    B, N_s, N_t, E = 2, 200, 120, 16
    params = init_params(kp)

    x_s = jax.random.normal(kxs, (N_s, F_xs), jnp.float32)
    x_t = jax.random.normal(kxt, (N_t, F_xt), jnp.float32)
    u = jax.random.normal(ku, (B, F_u), jnp.float32)
    batch_s = (jnp.arange(N_s) >= 120).astype(jnp.int32)     # [N_s]: 120 / 80 split
    batch_t = (jnp.arange(N_t) >= 70).astype(jnp.int32)      # [N_t]: 70 / 50 split
    # edge_index / edge_attr are accepted by the forward but unused (as in torch).
    edge_index = jax.random.randint(ke, (2, E), 0, N_s)
    edge_attr = jnp.zeros((E, 4), jnp.float32)

    ref = reference_forward(x_s, x_t, u, batch_s, batch_t, params)

    # bf16 pooling path (default): f32 accumulation, validate at 2e-2.
    out_bf16 = global_model_forward(x_s, x_t, edge_index, edge_attr, u,
                                    batch_s, batch_t, params, tile_n=256)
    out_bf16 = jax.block_until_ready(out_bf16)
    assert out_bf16.shape == (B, F_u)
    assert jnp.allclose(out_bf16, ref, atol=2e-2, rtol=2e-2), (out_bf16, ref)

    # f32 pooling path: tight tolerance against the f32 reference.
    out_f32 = global_model_forward(x_s, x_t, edge_index, edge_attr, u,
                                   batch_s, batch_t, params, tile_n=256,
                                   pool_in_f32=True)
    out_f32 = jax.block_until_ready(out_f32)
    assert jnp.allclose(out_f32, ref, atol=1e-4, rtol=1e-4), (out_f32, ref)

    print("KERNEL_OK")
</pallas_src>

<mosaic_0001>
module attributes {stable_mosaic.version = 11 : i64} {
  func.func @_global_model_kernel(%arg0: i32, %arg1: memref<1x256xi32, #tpu.memory_space<vmem>>, %arg2: memref<14x256xbf16, #tpu.memory_space<vmem>>, %arg3: memref<2x10xf32, #tpu.memory_space<vmem>>, %arg4: memref<10x10xf32, #tpu.memory_space<vmem>>, %arg5: memref<10x10xf32, #tpu.memory_space<vmem>>, %arg6: memref<2x10xf32, #tpu.memory_space<vmem>>, %arg7: memref<1x10xf32, #tpu.memory_space<vmem>>, %arg8: memref<10x10xf32, #tpu.memory_space<vmem>>, %arg9: memref<1x10xf32, #tpu.memory_space<vmem>>, %arg10: memref<2x10xf32, #tpu.memory_space<vmem>>, %arg11: memref<2x14xf32, #tpu.memory_space<vmem>>) attributes {dimension_semantics = [#tpu.dimension_semantics<arbitrary>], iteration_bounds = array<i64: 2>, scalar_prefetch = 0 : i64, scratch_operands = 1 : i64, tpu.core_type = #tpu.core_type<tc>, window_params = [{transform_indices = @transform_0, window_bounds = array<i64: 1, 256>}, {transform_indices = @transform_1, window_bounds = array<i64: 14, 256>}, {pipeline_mode = #tpu.pipeline_mode<synchronous>, transform_indices = @transform_2, window_bounds = array<i64: 2, 10>}, {pipeline_mode = #tpu.pipeline_mode<synchronous>, transform_indices = @transform_3, window_bounds = array<i64: 10, 10>}, {pipeline_mode = #tpu.pipeline_mode<synchronous>, transform_indices = @transform_4, window_bounds = array<i64: 10, 10>}, {pipeline_mode = #tpu.pipeline_mode<synchronous>, transform_indices = @transform_5, window_bounds = array<i64: 2, 10>}, {pipeline_mode = #tpu.pipeline_mode<synchronous>, transform_indices = @transform_6, window_bounds = array<i64: 1, 10>}, {pipeline_mode = #tpu.pipeline_mode<synchronous>, transform_indices = @transform_7, window_bounds = array<i64: 10, 10>}, {pipeline_mode = #tpu.pipeline_mode<synchronous>, transform_indices = @transform_8, window_bounds = array<i64: 1, 10>}, {pipeline_mode = #tpu.pipeline_mode<synchronous>, transform_indices = @transform_9, window_bounds = array<i64: 2, 10>}]} {
    %c0_i32 = arith.constant 0 : i32
    %0 = arith.cmpi eq, %arg0, %c0_i32 : i32
    %1 = arith.extui %0 : i1 to i32
    %c0_i32_0 = arith.constant 0 : i32
    %2 = arith.cmpi ne, %1, %c0_i32_0 : i32
    scf.if %2 {
      %cst_9 = arith.constant 0.000000e+00 : f32
      %18 = vector.broadcast %cst_9 : f32 to vector<2x14xf32>
      %c0_10 = arith.constant 0 : index
      %c0_11 = arith.constant 0 : index
      %19 = vector.load %arg11[%c0_10, %c0_11] : memref<2x14xf32, #tpu.memory_space<vmem>>, vector<2x14xf32>
      tpu.vector_store %arg11[%c0_10, %c0_11], %18 {strides = array<i32>} : memref<2x14xf32, #tpu.memory_space<vmem>>, vector<2x14xf32>,
    } else {
    }
    %c0 = arith.constant 0 : index
    %c0_1 = arith.constant 0 : index
    %3 = vector.load %arg2[%c0, %c0_1] : memref<14x256xbf16, #tpu.memory_space<vmem>>, vector<14x256xbf16>
    %4 = tpu.iota {dimensions = array<i32: 0>} : vector<2x256xi32>
    %c0_2 = arith.constant 0 : index
    %c0_3 = arith.constant 0 : index
    %5 = vector.load %arg1[%c0_2, %c0_3] : memref<1x256xi32, #tpu.memory_space<vmem>>, vector<1x256xi32>
    %6 = vector.broadcast %5 : vector<1x256xi32> to vector<2x256xi32>
    %7 = arith.cmpi eq, %4, %6 : vector<2x256xi32>
    %8 = arith.extui %7 : vector<2x256xi1> to vector<2x256xi32>
    %9 = arith.sitofp %8 : vector<2x256xi32> to vector<2x256xf32>
    %10 = arith.truncf %9 : vector<2x256xf32> to vector<2x256xbf16>
    %c0_4 = arith.constant 0 : index
    %c0_5 = arith.constant 0 : index
    %11 = vector.load %arg11[%c0_4, %c0_5] : memref<2x14xf32, #tpu.memory_space<vmem>>, vector<2x14xf32>
    %cst = arith.constant dense<0.000000e+00> : vector<2x14xf32>
    %12 = tpu.matmul %10, %3, %cst {dimension_numbers = #tpu.dot_dimension_numbers<[1], [1], [0], [0], [0, 0, 1, 0], [], []>} : vector<2x256xbf16>, vector<14x256xbf16>, vector<2x14xf32> -> vector<2x14xf32>
    %13 = arith.addf %11, %12 : vector<2x14xf32>
    %c0_6 = arith.constant 0 : index
    %c0_7 = arith.constant 0 : index
    %14 = vector.load %arg11[%c0_6, %c0_7] : memref<2x14xf32, #tpu.memory_space<vmem>>, vector<2x14xf32>
    tpu.vector_store %arg11[%c0_6, %c0_7], %13 {strides = array<i32>} : memref<2x14xf32, #tpu.memory_space<vmem>>, vector<2x14xf32>,
    %c1_i32 = arith.constant 1 : i32
    %15 = arith.cmpi eq, %arg0, %c1_i32 : i32
    %16 = arith.extui %15 : i1 to i32
    %c0_i32_8 = arith.constant 0 : i32
    %17 = arith.cmpi ne, %16, %c0_i32_8 : i32
    scf.if %17 {
      %c0_9 = arith.constant 0 : index
      %c0_10 = arith.constant 0 : index
      %18 = vector.load %arg11[%c0_9, %c0_10] : memref<2x14xf32, #tpu.memory_space<vmem>>, vector<2x14xf32>
      %19 = vector.extract_strided_slice %18 {offsets = [0, 0], sizes = [2, 10], strides = [1, 1]} : vector<2x14xf32> to vector<2x10xf32>
      %20 = vector.extract_strided_slice %18 {offsets = [0, 10], sizes = [2, 1], strides = [1, 1]} : vector<2x14xf32> to vector<2x1xf32>
      %21 = vector.extract_strided_slice %18 {offsets = [0, 11], sizes = [2, 2], strides = [1, 1]} : vector<2x14xf32> to vector<2x2xf32>
      %22 = vector.extract_strided_slice %18 {offsets = [0, 13], sizes = [2, 1], strides = [1, 1]} : vector<2x14xf32> to vector<2x1xf32>
      %cst_11 = arith.constant 1.000000e+00 : f32
      %23 = vector.broadcast %cst_11 : f32 to vector<2x1xf32>
      %24 = arith.maximumf %20, %23 : vector<2x1xf32>
      %25 = vector.broadcast %24 : vector<2x1xf32> to vector<2x10xf32>
      %26 = arith.divf %19, %25 : vector<2x10xf32>
      %cst_12 = arith.constant 1.000000e+00 : f32
      %27 = vector.broadcast %cst_12 : f32 to vector<2x1xf32>
      %28 = arith.maximumf %22, %27 : vector<2x1xf32>
      %29 = vector.broadcast %28 : vector<2x1xf32> to vector<2x2xf32>
      %30 = arith.divf %21, %29 : vector<2x2xf32>
      %c0_13 = arith.constant 0 : index
      %c0_14 = arith.constant 0 : index
      %31 = vector.load %arg3[%c0_13, %c0_14] : memref<2x10xf32, #tpu.memory_space<vmem>>, vector<2x10xf32>
      %c0_15 = arith.constant 0 : index
      %c0_16 = arith.constant 0 : index
      %32 = vector.load %arg4[%c0_15, %c0_16] : memref<10x10xf32, #tpu.memory_space<vmem>>, vector<10x10xf32>
      %cst_17 = arith.constant dense<0.000000e+00> : vector<2x10xf32>
      %33 = tpu.matmul %31, %32, %cst_17 {dimension_numbers = #tpu.dot_dimension_numbers<[1], [0], [0], [1], [0, 0, 1, 1], [], []>} : vector<2x10xf32>, vector<10x10xf32>, vector<2x10xf32> -> vector<2x10xf32>
      %c0_18 = arith.constant 0 : index
      %c0_19 = arith.constant 0 : index
      %34 = vector.load %arg5[%c0_18, %c0_19] : memref<10x10xf32, #tpu.memory_space<vmem>>, vector<10x10xf32>
      %cst_20 = arith.constant dense<0.000000e+00> : vector<2x10xf32>
      %35 = tpu.matmul %26, %34, %cst_20 {dimension_numbers = #tpu.dot_dimension_numbers<[1], [0], [0], [1], [0, 0, 1, 1], [], []>} : vector<2x10xf32>, vector<10x10xf32>, vector<2x10xf32> -> vector<2x10xf32>
      %36 = arith.addf %33, %35 : vector<2x10xf32>
      %c0_21 = arith.constant 0 : index
      %c0_22 = arith.constant 0 : index
      %37 = vector.load %arg6[%c0_21, %c0_22] : memref<2x10xf32, #tpu.memory_space<vmem>>, vector<2x10xf32>
      %cst_23 = arith.constant dense<0.000000e+00> : vector<2x10xf32>
      %38 = tpu.matmul %30, %37, %cst_23 {dimension_numbers = #tpu.dot_dimension_numbers<[1], [0], [0], [1], [0, 0, 1, 1], [], []>} : vector<2x2xf32>, vector<2x10xf32>, vector<2x10xf32> -> vector<2x10xf32>
      %39 = arith.addf %36, %38 : vector<2x10xf32>
      %c0_24 = arith.constant 0 : index
      %c0_25 = arith.constant 0 : index
      %40 = vector.load %arg7[%c0_24, %c0_25] : memref<1x10xf32, #tpu.memory_space<vmem>>, vector<1x10xf32>
      %41 = vector.broadcast %40 : vector<1x10xf32> to vector<2x10xf32>
      %42 = arith.addf %39, %41 : vector<2x10xf32>
      %cst_26 = arith.constant 0.000000e+00 : f32
      %43 = vector.broadcast %cst_26 : f32 to vector<2x10xf32>
      %44 = arith.cmpf ogt, %42, %43 : vector<2x10xf32>
      %cst_27 = arith.constant 1.000000e-01 : f32
      %45 = vector.broadcast %cst_27 : f32 to vector<2x10xf32>
      %46 = arith.mulf %45, %42 : vector<2x10xf32>
      %47 = arith.select %44, %42, %46 : vector<2x10xi1>, vector<2x10xf32>
      %c0_28 = arith.constant 0 : index
      %c0_29 = arith.constant 0 : index
      %48 = vector.load %arg8[%c0_28, %c0_29] : memref<10x10xf32, #tpu.memory_space<vmem>>, vector<10x10xf32>
      %cst_30 = arith.constant dense<0.000000e+00> : vector<2x10xf32>
      %49 = tpu.matmul %47, %48, %cst_30 {dimension_numbers = #tpu.dot_dimension_numbers<[1], [0], [0], [1], [0, 0, 1, 1], [], []>} : vector<2x10xf32>, vector<10x10xf32>, vector<2x10xf32> -> vector<2x10xf32>
      %c0_31 = arith.constant 0 : index
      %c0_32 = arith.constant 0 : index
      %50 = vector.load %arg9[%c0_31, %c0_32] : memref<1x10xf32, #tpu.memory_space<vmem>>, vector<1x10xf32>
      %51 = vector.broadcast %50 : vector<1x10xf32> to vector<2x10xf32>
      %52 = arith.addf %49, %51 : vector<2x10xf32>
      %c0_33 = arith.constant 0 : index
      %c0_34 = arith.constant 0 : index
      %53 = vector.load %arg10[%c0_33, %c0_34] : memref<2x10xf32, #tpu.memory_space<vmem>>, vector<2x10xf32>
      tpu.vector_store %arg10[%c0_33, %c0_34], %52 {strides = array<i32>} : memref<2x10xf32, #tpu.memory_space<vmem>>, vector<2x10xf32>,
    } else {
    }
    return
  }
  func.func @transform_0(%arg0: i32) -> (i32, i32) {
    %c0_i32 = arith.constant 0 : i32
    %c0_i32_0 = arith.constant 0 : i32
    return %c0_i32, %arg0 : i32, i32
  }
  func.func @transform_1(%arg0: i32) -> (i32, i32) {
    %c0_i32 = arith.constant 0 : i32
    %c0_i32_0 = arith.constant 0 : i32
    return %c0_i32, %arg0 : i32, i32
  }
  func.func @transform_2(%arg0: i32) -> (i32, i32) {
    %c0_i32 = arith.constant 0 : i32
    %c0_i32_0 = arith.constant 0 : i32
    %c0_i32_1 = arith.constant 0 : i32
    return %c0_i32, %c0_i32_0 : i32, i32
  }
  func.func @transform_3(%arg0: i32) -> (i32, i32) {
    %c0_i32 = arith.constant 0 : i32
    %c0_i32_0 = arith.constant 0 : i32
    %c0_i32_1 = arith.constant 0 : i32
    return %c0_i32, %c0_i32_0 : i32, i32
  }
  func.func @transform_4(%arg0: i32) -> (i32, i32) {
    %c0_i32 = arith.constant 0 : i32
    %c0_i32_0 = arith.constant 0 : i32
    %c0_i32_1 = arith.constant 0 : i32
    return %c0_i32, %c0_i32_0 : i32, i32
  }
  func.func @transform_5(%arg0: i32) -> (i32, i32) {
    %c0_i32 = arith.constant 0 : i32
    %c0_i32_0 = arith.constant 0 : i32
    %c0_i32_1 = arith.constant 0 : i32
    return %c0_i32, %c0_i32_0 : i32, i32
  }
  func.func @transform_6(%arg0: i32) -> (i32, i32) {
    %c0_i32 = arith.constant 0 : i32
    %c0_i32_0 = arith.constant 0 : i32
    %c0_i32_1 = arith.constant 0 : i32
    return %c0_i32, %c0_i32_0 : i32, i32
  }
  func.func @transform_7(%arg0: i32) -> (i32, i32) {
    %c0_i32 = arith.constant 0 : i32
    %c0_i32_0 = arith.constant 0 : i32
    %c0_i32_1 = arith.constant 0 : i32
    return %c0_i32, %c0_i32_0 : i32, i32
  }
  func.func @transform_8(%arg0: i32) -> (i32, i32) {
    %c0_i32 = arith.constant 0 : i32
    %c0_i32_0 = arith.constant 0 : i32
    %c0_i32_1 = arith.constant 0 : i32
    return %c0_i32, %c0_i32_0 : i32, i32
  }
  func.func @transform_9(%arg0: i32) -> (i32, i32) {
    %c0_i32 = arith.constant 0 : i32
    %c0_i32_0 = arith.constant 0 : i32
    %c0_i32_1 = arith.constant 0 : i32
    return %c0_i32, %c0_i32_0 : i32, i32
  }
}

</mosaic_0001>

<llo_original>
// kernel: global_model_forward.1
$region0: #{global_model_forward.1}
  #allocation0 [shape = 'u32[]', space=smem, size = 0x4, offset = 0x4, fixed_abs, tag = 'smem constant byte address 0x4 - core index']
  #allocation1 [shape = 'u32[144,128]{1,0:T(1,128)}', space=vmem, size = 0x12000, scoped, tag = 'internal scratch']
  #allocation2 [shape = 'f32[2,14]{1,0:T(2,128)}', space=vmem, size = 0x400, scoped, tag = 'scratch operand']
  %s0 = inlined_call_operand.vmem [shape: s32[1,512], index: 0, kind: input, shape index: {}]
  %s1 = inlined_call_operand.vmem [shape: bf16[14,512], index: 1, kind: input, shape index: {}]
  %s2 = inlined_call_operand.vmem [shape: f32[2,10], index: 2, kind: input, shape index: {}]
  %s3 = inlined_call_operand.vmem [shape: f32[10,10], index: 3, kind: input, shape index: {}]
  %s4 = inlined_call_operand.vmem [shape: f32[10,10], index: 4, kind: input, shape index: {}]
  %s5 = inlined_call_operand.vmem [shape: f32[2,10], index: 5, kind: input, shape index: {}]
  %s6 = inlined_call_operand.vmem [shape: f32[1,10], index: 6, kind: input, shape index: {}]
  %s7 = inlined_call_operand.vmem [shape: f32[10,10], index: 7, kind: input, shape index: {}]
  %s8 = inlined_call_operand.vmem [shape: f32[1,10], index: 8, kind: input, shape index: {}]
  %s9 = inlined_call_operand.hbm [shape: f32[2,10], index: 9, kind: output, shape index: {}]
  %s10 = sld [smem:[#allocation0]]
  $region115: #{global_model_forward.1} parent=0
    _
  %s12 = ssub.s32 1, %s10
  %s13 = scalar_select 0, %s12, %s10
  $region1: #{global_model_forward.1} parent=0
    #allocation3 [shape = 'u8[16384]{0}', space=vmem, size = 0x4000, scoped, tag = 'input window, operand 1']
    #allocation4 [shape = 'u8[1024]{0}', space=vmem, size = 0x400, scoped, tag = 'output window, operand 0, single buffered']
    #allocation5 [shape = 's32[2]{0}', space=sflag, size = 0x8, scoped, tag = 'scoped memory for global_model_forward.1']
    %14 = vsyncpa [#allocation5], 0
    loop: start=0, step=1, limit=4
    $region2: #{global_model_forward.1} parent=1 // loop_pre_header
      _
    $region3: #{global_model_forward.1} parent=1 // loop_header
      %s16 = sphi 0, %s20
      %p17 = scmp.ge.s32.totalorder %s16, 4
      %s26 = sphi 0, %s28
      %s29 = sphi 0, %s26
      %s30 = sphi 0, %s29
      %s46 = sphi 0, %s30
      %s52 = sphi 0, %s54
      %s55 = sphi 0, %s52
      %s56 = sphi 0, %s55
      %s72 = sphi 0, %s56
      %s76 = sphi 0, %s76
      %s78 = sphi 0, %s76
      %s79 = sphi 0, %s78
      %s93 = sphi 0, %s79
      %s97 = sphi 0, %s97
      %s99 = sphi 0, %s97
      %s100 = sphi 0, %s99
      %s114 = sphi 0, %s100
      %s118 = sphi 0, %s118
      %s120 = sphi 0, %s118
      %s121 = sphi 0, %s120
      %s135 = sphi 0, %s121
      %s139 = sphi 0, %s139
      %s141 = sphi 0, %s139
      %s142 = sphi 0, %s141
      %s156 = sphi 0, %s142
      %s160 = sphi 0, %s160
      %s162 = sphi 0, %s160
      %s163 = sphi 0, %s162
      %s177 = sphi 0, %s163
      %s181 = sphi 0, %s181
      %s183 = sphi 0, %s181
      %s184 = sphi 0, %s183
      %s198 = sphi 0, %s184
      %s202 = sphi 0, %s202
      %s204 = sphi 0, %s202
      %s205 = sphi 0, %s204
      %s219 = sphi 0, %s205
      %s223 = sphi 0, %s223
      %s225 = sphi 0, %s223
      %s226 = sphi 0, %s225
      %s240 = sphi 0, %s226
    $region4: #{global_model_forward.1} parent=1 // loop_header_branch
      %19 = sbr.rel (%p17) target = $region8
    $region5: #{global_model_forward.1} parent=1 // loop_body
      %s21 = ssub.s32 %s16, 1
      %s22 = ssub.s32 %s16, 2
      %s23 = sadd.s32 %s16, 1
      %s24 = ssub.s32 %s16, %s23
      %p25 = scmp.eq.s32.totalorder %s24, 0
      %s27 = sadd.s32 %s26, 1
      %s28 = scalar_select %p25, %s26, %s27
      %p31 = pneg %p25
      %p32 = scmp.eq.s32.totalorder %s16, 1
      %p33 = por %p31, %p32
      %p34 = scmp.ne.s32.totalorder %s26, %s29
      %p35 = scmp.eq.s32.totalorder %s16, 0
      %p36 = por %p34, %p35
      %p37 = scmp.ne.s32.totalorder %s26, %s29
      %p38 = scmp.eq.s32.totalorder %s21, 1
      %p39 = por %p37, %p38
      %p40 = scmp.ne.s32.totalorder %s29, %s30
      %p41 = scmp.eq.s32.totalorder %s21, 0
      %p42 = por %p40, %p41
      %p43 = scmp.ne.s32.totalorder %s29, %s30
      %p44 = scmp.eq.s32.totalorder %s22, 1
      %p45 = por %p43, %p44
      %p47 = scmp.ne.s32.totalorder %s30, %s46
      %p48 = scmp.eq.s32.totalorder %s22, 0
      %p49 = por %p47, %p48
      %s50 = ssub.s32 %s16, %s23
      %p51 = scmp.eq.s32.totalorder %s50, 0
      %s53 = sadd.s32 %s52, 1
      %s54 = scalar_select %p51, %s52, %s53
      %p57 = pneg %p51
      %p58 = scmp.eq.s32.totalorder %s16, 1
      %p59 = por %p57, %p58
      %p60 = scmp.ne.s32.totalorder %s52, %s55
      %p61 = scmp.eq.s32.totalorder %s16, 0
      %p62 = por %p60, %p61
      %p63 = scmp.ne.s32.totalorder %s52, %s55
      %p64 = scmp.eq.s32.totalorder %s21, 1
      %p65 = por %p63, %p64
      %p66 = scmp.ne.s32.totalorder %s55, %s56
      %p67 = scmp.eq.s32.totalorder %s21, 0
      %p68 = por %p66, %p67
      %p69 = scmp.ne.s32.totalorder %s55, %s56
      %p70 = scmp.eq.s32.totalorder %s22, 1
      %p71 = por %p69, %p70
      %p73 = scmp.ne.s32.totalorder %s56, %s72
      %p74 = scmp.eq.s32.totalorder %s22, 0
      %p75 = por %p73, %p74
      %s77 = sadd.s32 %s76, 1
      %p80 = scmp.eq.s32.totalorder %s16, 1
      %p81 = scmp.ne.s32.totalorder %s76, %s78
      %p82 = scmp.eq.s32.totalorder %s16, 0
      %p83 = por %p81, %p82
      %p84 = scmp.ne.s32.totalorder %s76, %s78
      %p85 = scmp.eq.s32.totalorder %s21, 1
      %p86 = por %p84, %p85
      %p87 = scmp.ne.s32.totalorder %s78, %s79
      %p88 = scmp.eq.s32.totalorder %s21, 0
      %p89 = por %p87, %p88
      %p90 = scmp.ne.s32.totalorder %s78, %s79
      %p91 = scmp.eq.s32.totalorder %s22, 1
      %p92 = por %p90, %p91
      %p94 = scmp.ne.s32.totalorder %s79, %s93
      %p95 = scmp.eq.s32.totalorder %s22, 0
      %p96 = por %p94, %p95
      %s98 = sadd.s32 %s97, 1
      %p101 = scmp.eq.s32.totalorder %s16, 1
      %p102 = scmp.ne.s32.totalorder %s97, %s99
      %p103 = scmp.eq.s32.totalorder %s16, 0
      %p104 = por %p102, %p103
      %p105 = scmp.ne.s32.totalorder %s97, %s99
      %p106 = scmp.eq.s32.totalorder %s21, 1
      %p107 = por %p105, %p106
      %p108 = scmp.ne.s32.totalorder %s99, %s100
      %p109 = scmp.eq.s32.totalorder %s21, 0
      %p110 = por %p108, %p109
      %p111 = scmp.ne.s32.totalorder %s99, %s100
      %p112 = scmp.eq.s32.totalorder %s22, 1
      %p113 = por %p111, %p112
      %p115 = scmp.ne.s32.totalorder %s100, %s114
      %p116 = scmp.eq.s32.totalorder %s22, 0
      %p117 = por %p115, %p116
      %s119 = sadd.s32 %s118, 1
      %p122 = scmp.eq.s32.totalorder %s16, 1
      %p123 = scmp.ne.s32.totalorder %s118, %s120
      %p124 = scmp.eq.s32.totalorder %s16, 0
      %p125 = por %p123, %p124
      %p126 = scmp.ne.s32.totalorder %s118, %s120
      %p127 = scmp.eq.s32.totalorder %s21, 1
      %p128 = por %p126, %p127
      %p129 = scmp.ne.s32.totalorder %s120, %s121
      %p130 = scmp.eq.s32.totalorder %s21, 0
      %p131 = por %p129, %p130
      %p132 = scmp.ne.s32.totalorder %s120, %s121
      %p133 = scmp.eq.s32.totalorder %s22, 1
      %p134 = por %p132, %p133
      %p136 = scmp.ne.s32.totalorder %s121, %s135
      %p137 = scmp.eq.s32.totalorder %s22, 0
      %p138 = por %p136, %p137
      %s140 = sadd.s32 %s139, 1
      %p143 = scmp.eq.s32.totalorder %s16, 1
      %p144 = scmp.ne.s32.totalorder %s139, %s141
      %p145 = scmp.eq.s32.totalorder %s16, 0
      %p146 = por %p144, %p145
      %p147 = scmp.ne.s32.totalorder %s139, %s141
      %p148 = scmp.eq.s32.totalorder %s21, 1
      %p149 = por %p147, %p148
      %p150 = scmp.ne.s32.totalorder %s141, %s142
      %p151 = scmp.eq.s32.totalorder %s21, 0
      %p152 = por %p150, %p151
      %p153 = scmp.ne.s32.totalorder %s141, %s142
      %p154 = scmp.eq.s32.totalorder %s22, 1
      %p155 = por %p153, %p154
      %p157 = scmp.ne.s32.totalorder %s142, %s156
      %p158 = scmp.eq.s32.totalorder %s22, 0
      %p159 = por %p157, %p158
      %s161 = sadd.s32 %s160, 1
      %p164 = scmp.eq.s32.totalorder %s16, 1
      %p165 = scmp.ne.s32.totalorder %s160, %s162
      %p166 = scmp.eq.s32.totalorder %s16, 0
      %p167 = por %p165, %p166
      %p168 = scmp.ne.s32.totalorder %s160, %s162
      %p169 = scmp.eq.s32.totalorder %s21, 1
      %p170 = por %p168, %p169
      %p171 = scmp.ne.s32.totalorder %s162, %s163
      %p172 = scmp.eq.s32.totalorder %s21, 0
      %p173 = por %p171, %p172
      %p174 = scmp.ne.s32.totalorder %s162, %s163
      %p175 = scmp.eq.s32.totalorder %s22, 1
      %p176 = por %p174, %p175
      %p178 = scmp.ne.s32.totalorder %s163, %s177
      %p179 = scmp.eq.s32.totalorder %s22, 0
      %p180 = por %p178, %p179
      %s182 = sadd.s32 %s181, 1
      %p185 = scmp.eq.s32.totalorder %s16, 1
      %p186 = scmp.ne.s32.totalorder %s181, %s183
      %p187 = scmp.eq.s32.totalorder %s16, 0
      %p188 = por %p186, %p187
      %p189 = scmp.ne.s32.totalorder %s181, %s183
      %p190 = scmp.eq.s32.totalorder %s21, 1
      %p191 = por %p189, %p190
      %p192 = scmp.ne.s32.totalorder %s183, %s184
      %p193 = scmp.eq.s32.totalorder %s21, 0
      %p194 = por %p192, %p193
      %p195 = scmp.ne.s32.totalorder %s183, %s184
      %p196 = scmp.eq.s32.totalorder %s22, 1
      %p197 = por %p195, %p196
      %p199 = scmp.ne.s32.totalorder %s184, %s198
      %p200 = scmp.eq.s32.totalorder %s22, 0
      %p201 = por %p199, %p200
      %s203 = sadd.s32 %s202, 1
      %p206 = scmp.eq.s32.totalorder %s16, 1
      %p207 = scmp.ne.s32.totalorder %s202, %s204
      %p208 = scmp.eq.s32.totalorder %s16, 0
      %p209 = por %p207, %p208
      %p210 = scmp.ne.s32.totalorder %s202, %s204
      %p211 = scmp.eq.s32.totalorder %s21, 1
      %p212 = por %p210, %p211
      %p213 = scmp.ne.s32.totalorder %s204, %s205
      %p214 = scmp.eq.s32.totalorder %s21, 0
      %p215 = por %p213, %p214
      %p216 = scmp.ne.s32.totalorder %s204, %s205
      %p217 = scmp.eq.s32.totalorder %s22, 1
      %p218 = por %p216, %p217
      %p220 = scmp.ne.s32.totalorder %s205, %s219
      %p221 = scmp.eq.s32.totalorder %s22, 0
      %p222 = por %p220, %p221
      %s224 = sadd.s32 %s223, 1
      %p227 = scmp.eq.s32.totalorder %s16, 1
      %p228 = scmp.ne.s32.totalorder %s223, %s225
      %p229 = scmp.eq.s32.totalorder %s16, 0
      %p230 = por %p228, %p229
      %p231 = scmp.ne.s32.totalorder %s223, %s225
      %p232 = scmp.eq.s32.totalorder %s21, 1
      %p233 = por %p231, %p232
      %p234 = scmp.ne.s32.totalorder %s225, %s226
      %p235 = scmp.eq.s32.totalorder %s21, 0
      %p236 = por %p234, %p235
      %p237 = scmp.ne.s32.totalorder %s225, %s226
      %p238 = scmp.eq.s32.totalorder %s22, 1
      %p239 = por %p237, %p238
      %p241 = scmp.ne.s32.totalorder %s226, %s240
      %p242 = scmp.eq.s32.totalorder %s22, 0
      %p243 = por %p241, %p242
      %p244 = scmp.le.s32.totalorder 1, %s16
      %p245 = scmp.lt.s32.totalorder %s16, 3
      %p246 = pnand %p244, %p245
      %p247 = pneg %p246
      // Predicated region
      $region9: #{global_model_forward.1} parent=5 // pred_check
        _
      $region10: #{global_model_forward.1} parent=5 // pred_check_branch
        %249 = sbr.rel (%p246) target = $region12
      $region11: #{global_model_forward.1} parent=5 // pred_region
        %s250 = ssub.s32 %s16, 1
        // Predicated region
        $region13: #{global_model_forward.1} parent=11 // pred_check
          %p251 = pneg %p89
        $region14: #{global_model_forward.1} parent=11 // pred_check_branch
          %253 = sbr.rel (%p251) target = $region16
        $region15: #{global_model_forward.1} parent=11 // pred_region
          _
        $region16: #{global_model_forward.1} parent=11 // pred_fallthru
          _
        // Predicated region
        $region17: #{global_model_forward.1} parent=11 // pred_check
          %p254 = pneg %p110
        $region18: #{global_model_forward.1} parent=11 // pred_check_branch
          %256 = sbr.rel (%p254) target = $region20
        $region19: #{global_model_forward.1} parent=11 // pred_region
          _
        $region20: #{global_model_forward.1} parent=11 // pred_fallthru
          _
        // Predicated region
        $region21: #{global_model_forward.1} parent=11 // pred_check
          %p257 = pneg %p131
        $region22: #{global_model_forward.1} parent=11 // pred_check_branch
          %259 = sbr.rel (%p257) target = $region24
        $region23: #{global_model_forward.1} parent=11 // pred_region
          _
        $region24: #{global_model_forward.1} parent=11 // pred_fallthru
          _
        // Predicated region
        $region25: #{global_model_forward.1} parent=11 // pred_check
          %p260 = pneg %p152
        $region26: #{global_model_forward.1} parent=11 // pred_check_branch
          %262 = sbr.rel (%p260) target = $region28
        $region27: #{global_model_forward.1} parent=11 // pred_region
          _
        $region28: #{global_model_forward.1} parent=11 // pred_fallthru
          _
        // Predicated region
        $region29: #{global_model_forward.1} parent=11 // pred_check
          %p263 = pneg %p173
        $region30: #{global_model_forward.1} parent=11 // pred_check_branch
          %265 = sbr.rel (%p263) target = $region32
        $region31: #{global_model_forward.1} parent=11 // pred_region
          _
        $region32: #{global_model_forward.1} parent=11 // pred_fallthru
          _
        // Predicated region
        $region33: #{global_model_forward.1} parent=11 // pred_check
          %p266 = pneg %p194
        $region34: #{global_model_forward.1} parent=11 // pred_check_branch
          %268 = sbr.rel (%p266) target = $region36
        $region35: #{global_model_forward.1} parent=11 // pred_region
          _
        $region36: #{global_model_forward.1} parent=11 // pred_fallthru
          _
        // Predicated region
        $region37: #{global_model_forward.1} parent=11 // pred_check
          %p269 = pneg %p215
        $region38: #{global_model_forward.1} parent=11 // pred_check_branch
          %271 = sbr.rel (%p269) target = $region40
        $region39: #{global_model_forward.1} parent=11 // pred_region
          _
        $region40: #{global_model_forward.1} parent=11 // pred_fallthru
          _
      $region12: #{global_model_forward.1} parent=5 // pred_fallthru
        _
      %p272 = scmp.lt.s32.totalorder %s16, 2
      // Predicated region
      $region41: #{global_model_forward.1} parent=5 // pred_check
        %p273 = pneg %p272
      $region42: #{global_model_forward.1} parent=5 // pred_check_branch
        %275 = sbr.rel (%p273) target = $region44
      $region43: #{global_model_forward.1} parent=5 // pred_region
        // Predicated region
        $region45: #{global_model_forward.1} parent=43 // pred_check
          %p276 = pneg %p36
        $region46: #{global_model_forward.1} parent=43 // pred_check_branch
          %278 = sbr.rel (%p276) target = $region48
        $region47: #{global_model_forward.1} parent=43 // pred_region
          %s279 = smul.u32 2, %s16
          %p280 = scmp.lt.s32.totalorder %s279, 3
          %s281 = scalar_select %p280, %s279, 3
          %s282 = scalar_lea.vmem %s0, %s281
          %s283 = smul.u32 2, %s16
        $region48: #{global_model_forward.1} parent=43 // pred_fallthru
          _
        // Predicated region
        $region49: #{global_model_forward.1} parent=43 // pred_check
          %p284 = pneg %p62
        $region50: #{global_model_forward.1} parent=43 // pred_check_branch
          %286 = sbr.rel (%p284) target = $region52
        $region51: #{global_model_forward.1} parent=43 // pred_region
          %s287 = sand.u32 %s52, 1
          %s288 = sand.u32 %s52, 1
          %s289 = smul.addr %s288, 16
          %s290 = scalar_lea.vmem [#allocation3], %s289
          %s291 = smul.u32 2, %s16
          %s292 = smul.addr %s291, 4
          %s293 = scalar_lea.vmem %s1, %s292
          // Predicated region
          $region53: #{global_model_forward.1} parent=51 // pred_check
            _
          $region54: #{global_model_forward.1} parent=51 // pred_check_branch
            %295 = sbr.rel (0) target = $region56
          $region55: #{global_model_forward.1} parent=51 // pred_region
            // Predicated region
            $region57: #{global_model_forward.1} parent=55 // pred_check
              _
            $region58: #{global_model_forward.1} parent=55 // pred_check_branch
              %297 = sbr.rel (0) target = $region60
            $region59: #{global_model_forward.1} parent=55 // pred_region
              // Predicated region
              $region72: #{global_model_forward.1} parent=59 // pred_check
                _
              $region73: #{global_model_forward.1} parent=59 // pred_check_branch
                %315 = sbr.rel (0) target = $region75
              $region74: #{global_model_forward.1} parent=59 // pred_region
                loop: start=0, step=1, limit=1
                $region76: #{global_model_forward.1} parent=74 // loop_pre_header
                  _
                $region77: #{global_model_forward.1} parent=74 // loop_header
                  %s317 = sphi 0, %s321
                  %p318 = scmp.ge.s32.totalorder %s317, 1
                  %s322 = sphi %s293, %s293
                  %s323 = sphi %s290, %s290
                $region78: #{global_model_forward.1} parent=74 // loop_header_branch
                  %320 = sbr.rel (%p318) target = $region82
                $region79: #{global_model_forward.1} parent=74 // loop_body
                  %v324 = vld [vmem:[%s322] sm:$0xff]
                  %325 = vst [vmem:[%s323] sm:$0xff] %v324
                  %v326 = vld [vmem:[%s322 + $0x10] sm:$0xff]
                  %327 = vst [vmem:[%s323 + $0x8] sm:$0xff] %v326
                $region80: #{global_model_forward.1} parent=74 // loop_footer
                  %s321 = sadd.s32 1, %s317
                $region81: #{global_model_forward.1} parent=74 // loop_footer_branch
                  %316 = sbr.rel target = $region77
                $region82: #{global_model_forward.1} parent=74 // loop_exit
                  _
              $region75: #{global_model_forward.1} parent=59 // pred_fallthru
                _
              // Predicated region
              $region83: #{global_model_forward.1} parent=59 // pred_check
                _
              $region84: #{global_model_forward.1} parent=59 // pred_check_branch
                %329 = sbr.rel target = $region86
              $region85: #{global_model_forward.1} parent=59 // pred_region
                _
              $region86: #{global_model_forward.1} parent=59 // pred_fallthru
                _
            $region60: #{global_model_forward.1} parent=55 // pred_fallthru
              _
            // Predicated region
            $region61: #{global_model_forward.1} parent=55 // pred_check
              _
            $region62: #{global_model_forward.1} parent=55 // pred_check_branch
              %299 = sbr.rel target = $region64
            $region63: #{global_model_forward.1} parent=55 // pred_region
              %s301 = ssub.s32 256, 1
              loop: start=0, step=1, limit=1
              $region65: #{global_model_forward.1} parent=63 // loop_pre_header
                _
              $region66: #{global_model_forward.1} parent=63 // loop_header
                %s303 = sphi 0, %s307
                %p304 = scmp.ge.s32.totalorder %s303, 1
                %s308 = sphi %s293, %s293
                %s309 = sphi %s290, %s290
              $region67: #{global_model_forward.1} parent=63 // loop_header_branch
                %306 = sbr.rel (%p304) target = $region71
              $region68: #{global_model_forward.1} parent=63 // loop_body
                %v310 = vld [vmem:[%s308] sm:%s301]
                %311 = vst [vmem:[%s309] sm:%s301] %v310
                %v312 = vld [vmem:[%s308 + $0x10] sm:%s301]
                %313 = vst [vmem:[%s309 + $0x8] sm:%s301] %v312
              $region69: #{global_model_forward.1} parent=63 // loop_footer
                %s307 = sadd.s32 1, %s303
              $region70: #{global_model_forward.1} parent=63 // loop_footer_branch
                %302 = sbr.rel target = $region66
              $region71: #{global_model_forward.1} parent=63 // loop_exit
                _
            $region64: #{global_model_forward.1} parent=55 // pred_fallthru
              _
          $region56: #{global_model_forward.1} parent=51 // pred_fallthru
            _
          %330 = vnop
        $region52: #{global_model_forward.1} parent=43 // pred_fallthru
          _
      $region44: #{global_model_forward.1} parent=5 // pred_fallthru
        _
      %p331 = scmp.le.s32.totalorder 1, %s16
      %p332 = scmp.lt.s32.totalorder %s16, 3
      %p333 = pnand %p331, %p332
      %p334 = pneg %p333
      // Predicated region
      $region87: #{global_model_forward.1} parent=5 // pred_check
        _
      $region88: #{global_model_forward.1} parent=5 // pred_check_branch
        %336 = sbr.rel (%p333) target = $region90
      $region89: #{global_model_forward.1} parent=5 // pred_region
        %s337 = ssub.s32 %s16, 1
        %s338 = sand.u32 %s55, 1
        %s339 = sand.u32 %s55, 1
        %s340 = smul.addr %s339, 16
        %s341 = scalar_lea.vmem [#allocation3], %s340
        // Predicated region
        $region91: #{global_model_forward.1} parent=89 // pred_check
          %p342 = pneg %p68
        $region92: #{global_model_forward.1} parent=89 // pred_check_branch
          %344 = sbr.rel (%p342) target = $region94
        $region93: #{global_model_forward.1} parent=89 // pred_region
          _
        $region94: #{global_model_forward.1} parent=89 // pred_fallthru
          _
        %s345 = smul.u32 2, %s21
        %p346 = scmp.lt.s32.totalorder %s345, 3
        %s347 = scalar_select %p346, %s345, 3
        %s348 = scalar_lea.vmem %s0, %s347
        %p349 = pneg %p42
        %p350 = pneg %p39
        %s351 = sand.u32 %s55, 1
        %s352 = sand.u32 %s55, 1
        %s353 = smul.addr %s352, 16
        %s354 = scalar_lea.vmem [#allocation3], %s353
        %p355 = pneg %p68
        %p356 = pneg %p65
        %p357 = pneg %p89
        %p358 = pneg %p86
        %p359 = pneg %p110
        %p360 = pneg %p107
        %p361 = pneg %p131
        %p362 = pneg %p128
        %p363 = pneg %p152
        %p364 = pneg %p149
        %p365 = pneg %p173
        %p366 = pneg %p170
        %p367 = pneg %p194
        %p368 = pneg %p191
        %p369 = pneg %p215
        %p370 = pneg %p212
        %p371 = pneg %p236
        %p372 = pneg %p233
        %s373 = smul.u32 2, %s21
        %p374 = scmp.lt.s32.totalorder %s373, 3
        %s375 = scalar_select %p374, %s373, 3
        %s376 = scalar_lea.vmem %s0, %s375
        %s377 = smul.u32 2, %s21
        %s378 = smul.u32 2, %s21
        %p380 = scmp.eq.s32.totalorder %s21, 0
        // Predicated region
        $region95: #{global_model_forward.1} parent=89 // pred_check
          %p381 = pneg %p380
        $region96: #{global_model_forward.1} parent=89 // pred_check_branch
          %383 = sbr.rel (%p381) target = $region98
        $region97: #{global_model_forward.1} parent=89 // pred_region
          %vm384 = vcmask 107520
          %385 = vst.msk [vmem:[#allocation2] sm:$0x3] %vm384, 0.0
        $region98: #{global_model_forward.1} parent=89 // pred_fallthru
          _
        %v386 = vld [vmem:[%s341] sm:$0xff]
        %v387 = vld [vmem:[%s341 + $0x8] sm:$0x77]
        %v388 = vlaneseq
        %v389 = vshrl.u32 %v388, 7
        %v390 = vld [vmem:[%s376] sm:$0x3]
        %v391 = vlaneseq
        %v392 = vshrl.u32 %v391, 7
        %v393 = vsub.s32 0, %v392
        %v394 = vrot.slane %v390, %v393
        %v395 = vlaneseq
        %v396 = vshrl.u32 %v395, 7
        %v397 = vsub.s32 1, %v396
        %v398 = vrot.slane %v390, %v397
        %vm399 = vcmp.eq.s32.totalorder %v389, %v394
        %vm400 = vcmp.eq.s32.totalorder %v389, %v398
        %v401 = vsel %vm399, 1, 0
        %v402 = vsel %vm400, 1, 0
        %v403 = vcvt.s32.f32 %v401
        %v404 = vcvt.s32.f32 %v402
        %v405 = vpack.c.bf16 %v403, %v403
        %v406 = vpack.c.bf16 %v404, %v404
        %v407 = vld [vmem:[#allocation2] sm:$0x3]
        %v410 = vunpack.c.l.b16 %v386
        %v411 = vunpack.c.h.b16 %v386
        %v412 = vunpack.c.l.b16 %v387
        %v413 = vunpack.c.h.b16 %v387
        %v414 = vpack.c.b16 %v412, %v410
        %v415 = vpack.c.b16 %v413, %v411
        %418 = vmatprep.subr.bf16.mxu0 0
        %419 = vmatpush1.bf16.xpose.msra.mxu0 0
        %420 = vmatprep.subr.bf16.mxu0 0
        %421 = vmatpush1.bf16.xpose.msra.mxu0 0
        %422 = vmatprep.subr.bf16.mxu0 0
        %423 = vmatpush1.bf16.xpose.msra.mxu0 0
        %424 = vmatprep.subr.bf16.mxu0 0
        %425 = vmatpush1.bf16.xpose.msra.mxu0 0
        %426 = vmatprep.subr.bf16.mxu0 0
        %427 = vmatpush1.bf16.xpose.msra.mxu0 0
        %428 = vmatprep.subr.bf16.mxu0 0
        %429 = vmatpush1.bf16.xpose.msra.mxu0 0
        %430 = vmatprep.subr.bf16.mxu0 0
        %431 = vmatpush1.bf16.xpose.msra.mxu0 0
        %432 = vmatprep.subr.bf16.mxu0 %v415
        %433 = vmatpush1.bf16.xpose.msra.mxu0 %v414
        %434 = vmatprep.subr.bf16.mxu0 0
        %435 = vmatpush2.bf16.xpose.msra.mxu0 0
        %436 = vmatprep.subr.bf16.mxu0 0
        %437 = vmatpush2.bf16.xpose.msra.mxu0 0
        %438 = vmatprep.subr.bf16.mxu0 0
        %439 = vmatpush2.bf16.xpose.msra.mxu0 0
        %440 = vmatprep.subr.bf16.mxu0 0
        %441 = vmatpush2.bf16.xpose.msra.mxu0 0
        %442 = vmatprep.subr.bf16.mxu0 0
        %443 = vmatpush2.bf16.xpose.msra.mxu0 0
        %444 = vmatprep.subr.bf16.mxu0 0
        %445 = vmatpush2.bf16.xpose.msra.mxu0 0
        %446 = vmatprep.subr.bf16.mxu0 0
        %447 = vmatpush2.bf16.xpose.msra.mxu0 0
        %448 = vmatprep.subr.bf16.mxu0 0
        %449 = vmatpush2.bf16.xpose.msra.mxu0 0
        %450 = vmatprep.mubr.bf16.mxu0 %v406
        %451 = vmatmul.mubr.bf16.gmra.mxu0 %v405
        %v452 = vpop.f32.mrf.mxu0
        %v453 = vadd.f32 0.0, %v452
        %v454 = vpop.f32.mrf.mxu0
        %v455 = vpop.f32.mrf.mxu0
        %v456 = vpop.f32.mrf.mxu0
        %457 = vdwg.mxu0
        %v458 = vadd.f32 %v407, %v453
        %vm459 = vcmask 107520
        %460 = vst.msk [vmem:[#allocation2] sm:$0x3] %vm459, %v458
        %p461 = scmp.eq.s32.totalorder %s21, 1
        // Predicated region
        $region99: #{global_model_forward.1} parent=89 // pred_check
          %p462 = pneg %p461
        $region100: #{global_model_forward.1} parent=89 // pred_check_branch
          %464 = sbr.rel (%p462) target = $region102
        $region101: #{global_model_forward.1} parent=89 // pred_region
          %v465 = vld [vmem:[#allocation2] sm:$0x3]
          %v466 = vmax.f32 %v465, 1.0
          %468 = vset.pattern.permute.xlu0 10
          %469 = vperm.xlu0 %468, %v466
          %v470 = vpop.permute.xlu0 %469
          %v472 = vrcp.pop %v470
          %v473 = vmul.f32 %v465, %v472
          %474 = vset.pattern.permute.xlu0 13
          %475 = vperm.xlu0 %474, %v466
          %v476 = vpop.permute.xlu0 %475
          %v478 = vrcp.pop %v476
          %v479 = vmul.f32 %v465, %v478
          %v480 = vld [vmem:[%s2] sm:$0x3]
          %v481 = vld [vmem:[%s3] sm:$0xff]
          %v482 = vld [vmem:[%s3 + $0x8] sm:$0x3]
          %v483 = vld [vmem:[%s4] sm:$0xff]
          %v484 = vld [vmem:[%s4 + $0x8] sm:$0x3]
          %vm485 = vcmask 80896
          %v487 = vsel %vm485, %v473, 0
          %vm489 = vcmask 1041408
          %v491 = vsel %vm489, %v484, 0
          %493 = vmatprep.subr.mxu0 0.0
          %494 = vmatpush1.msra.mxu0 0.0
          %495 = vmatprep.subr.mxu0 0.0
          %496 = vmatpush1.msra.mxu0 0.0
          %497 = vmatprep.subr.mxu0 0.0
          %498 = vmatpush1.msra.mxu0 0.0
          %499 = vmatprep.subr.mxu0 0.0
          %500 = vmatpush1.msra.mxu0 0.0
          %501 = vmatprep.subr.mxu0 0.0
          %502 = vmatpush1.msra.mxu0 0.0
          %503 = vmatprep.subr.mxu0 0.0
          %504 = vmatpush1.msra.mxu0 0.0
          %505 = vmatprep.subr.mxu0 0.0
          %506 = vmatpush1.msra.mxu0 0.0
          %507 = vmatprep.subr.mxu0 0.0
          %508 = vmatpush1.msra.mxu0 0.0
          %509 = vmatprep.subr.mxu0 0.0
          %510 = vmatpush1.msra.mxu0 0.0
          %511 = vmatprep.subr.mxu0 0.0
          %512 = vmatpush1.msra.mxu0 0.0
          %513 = vmatprep.subr.mxu0 0.0
          %514 = vmatpush1.msra.mxu0 0.0
          %515 = vmatprep.subr.mxu0 0.0
          %516 = vmatpush1.msra.mxu0 0.0
          %517 = vmatprep.subr.mxu0 0.0
          %518 = vmatpush1.msra.mxu0 0.0
          %519 = vmatprep.subr.mxu0 0.0
          %520 = vmatpush1.msra.mxu0 0.0
          %521 = vmatprep.subr.mxu0 0.0
          %522 = vmatpush1.msra.mxu0 %v491
          %523 = vmatprep.subr.mxu0 0.0
          %524 = vmatpush1.msra.mxu0 %v483
          %525 = vmatprep.subr.mxu0 0.0
          %526 = vmatpush2.msra.mxu0 0.0
          %527 = vmatprep.subr.mxu0 0.0
          %528 = vmatpush2.msra.mxu0 0.0
          %529 = vmatprep.subr.mxu0 0.0
          %530 = vmatpush2.msra.mxu0 0.0
          %531 = vmatprep.subr.mxu0 0.0
          %532 = vmatpush2.msra.mxu0 0.0
          %533 = vmatprep.subr.mxu0 0.0
          %534 = vmatpush2.msra.mxu0 0.0
          %535 = vmatprep.subr.mxu0 0.0
          %536 = vmatpush2.msra.mxu0 0.0
          %537 = vmatprep.subr.mxu0 0.0
          %538 = vmatpush2.msra.mxu0 0.0
          %539 = vmatprep.subr.mxu0 0.0
          %540 = vmatpush2.msra.mxu0 0.0
          %541 = vmatprep.subr.mxu0 0.0
          %542 = vmatpush2.msra.mxu0 0.0
          %543 = vmatprep.subr.mxu0 0.0
          %544 = vmatpush2.msra.mxu0 0.0
          %545 = vmatprep.subr.mxu0 0.0
          %546 = vmatpush2.msra.mxu0 0.0
          %547 = vmatprep.subr.mxu0 0.0
          %548 = vmatpush2.msra.mxu0 0.0
          %549 = vmatprep.subr.mxu0 0.0
          %550 = vmatpush2.msra.mxu0 0.0
          %551 = vmatprep.subr.mxu0 0.0
          %552 = vmatpush2.msra.mxu0 0.0
          %553 = vmatprep.subr.mxu0 0.0
          %554 = vmatpush2.msra.mxu0 0.0
          %555 = vmatprep.subr.mxu0 0.0
          %556 = vmatpush2.msra.mxu0 0.0
          %557 = vmatprep.mubr.f32.mxu0 0.0
          %558 = vmatmul.mubr.f32.gmra.mxu0 %v487
          %v559 = vpop.f32.mrf.mxu0
          %v560 = vadd.f32 0.0, %v559
          %v561 = vpop.f32.mrf.mxu0
          %562 = vdwg.mxu0
          %v564 = vsel %vm485, %v480, 0
          %v567 = vsel %vm489, %v482, 0
          %569 = vmatprep.subr.mxu0 0.0
          %570 = vmatpush1.msra.mxu0 0.0
          %571 = vmatprep.subr.mxu0 0.0
          %572 = vmatpush1.msra.mxu0 0.0
          %573 = vmatprep.subr.mxu0 0.0
          %574 = vmatpush1.msra.mxu0 0.0
          %575 = vmatprep.subr.mxu0 0.0
          %576 = vmatpush1.msra.mxu0 0.0
          %577 = vmatprep.subr.mxu0 0.0
          %578 = vmatpush1.msra.mxu0 0.0
          %579 = vmatprep.subr.mxu0 0.0
          %580 = vmatpush1.msra.mxu0 0.0
          %581 = vmatprep.subr.mxu0 0.0
          %582 = vmatpush1.msra.mxu0 0.0
          %583 = vmatprep.subr.mxu0 0.0
          %584 = vmatpush1.msra.mxu0 0.0
          %585 = vmatprep.subr.mxu0 0.0
          %586 = vmatpush1.msra.mxu0 0.0
          %587 = vmatprep.subr.mxu0 0.0
          %588 = vmatpush1.msra.mxu0 0.0
          %589 = vmatprep.subr.mxu0 0.0
          %590 = vmatpush1.msra.mxu0 0.0
          %591 = vmatprep.subr.mxu0 0.0
          %592 = vmatpush1.msra.mxu0 0.0
          %593 = vmatprep.subr.mxu0 0.0
          %594 = vmatpush1.msra.mxu0 0.0
          %595 = vmatprep.subr.mxu0 0.0
          %596 = vmatpush1.msra.mxu0 0.0
          %597 = vmatprep.subr.mxu0 0.0
          %598 = vmatpush1.msra.mxu0 %v567
          %599 = vmatprep.subr.mxu0 0.0
          %600 = vmatpush1.msra.mxu0 %v481
          %601 = vmatprep.subr.mxu0 0.0
          %602 = vmatpush2.msra.mxu0 0.0
          %603 = vmatprep.subr.mxu0 0.0
          %604 = vmatpush2.msra.mxu0 0.0
          %605 = vmatprep.subr.mxu0 0.0
          %606 = vmatpush2.msra.mxu0 0.0
          %607 = vmatprep.subr.mxu0 0.0
          %608 = vmatpush2.msra.mxu0 0.0
          %609 = vmatprep.subr.mxu0 0.0
          %610 = vmatpush2.msra.mxu0 0.0
          %611 = vmatprep.subr.mxu0 0.0
          %612 = vmatpush2.msra.mxu0 0.0
          %613 = vmatprep.subr.mxu0 0.0
          %614 = vmatpush2.msra.mxu0 0.0
          %615 = vmatprep.subr.mxu0 0.0
          %616 = vmatpush2.msra.mxu0 0.0
          %617 = vmatprep.subr.mxu0 0.0
          %618 = vmatpush2.msra.mxu0 0.0
          %619 = vmatprep.subr.mxu0 0.0
          %620 = vmatpush2.msra.mxu0 0.0
          %621 = vmatprep.subr.mxu0 0.0
          %622 = vmatpush2.msra.mxu0 0.0
          %623 = vmatprep.subr.mxu0 0.0
          %624 = vmatpush2.msra.mxu0 0.0
          %625 = vmatprep.subr.mxu0 0.0
          %626 = vmatpush2.msra.mxu0 0.0
          %627 = vmatprep.subr.mxu0 0.0
          %628 = vmatpush2.msra.mxu0 0.0
          %629 = vmatprep.subr.mxu0 0.0
          %630 = vmatpush2.msra.mxu0 0.0
          %631 = vmatprep.subr.mxu0 0.0
          %632 = vmatpush2.msra.mxu0 0.0
          %633 = vmatprep.mubr.f32.mxu0 0.0
          %634 = vmatmul.mubr.f32.gmra.mxu0 %v564
          %v635 = vpop.f32.mrf.mxu0
          %v636 = vadd.f32 %v560, %v635
          %v637 = vpop.f32.mrf.mxu0
          %638 = vdwg.mxu0
          %v639 = vld [vmem:[%s5] sm:$0x3]
          %641 = vrot.lane.b32.xlu0 %v479, 117
          %v642 = vpop.permute.xlu0 %641
          %vm643 = vcmask 15360
          %v644 = vsel %vm643, %v642, 0
          %v647 = vsel %vm489, %v639, 0
          %649 = vmatprep.subr.mxu0 0.0
          %650 = vmatpush1.msra.mxu0 0.0
          %651 = vmatprep.subr.mxu0 0.0
          %652 = vmatpush1.msra.mxu0 0.0
          %653 = vmatprep.subr.mxu0 0.0
          %654 = vmatpush1.msra.mxu0 0.0
          %655 = vmatprep.subr.mxu0 0.0
          %656 = vmatpush1.msra.mxu0 0.0
          %657 = vmatprep.subr.mxu0 0.0
          %658 = vmatpush1.msra.mxu0 0.0
          %659 = vmatprep.subr.mxu0 0.0
          %660 = vmatpush1.msra.mxu0 0.0
          %661 = vmatprep.subr.mxu0 0.0
          %662 = vmatpush1.msra.mxu0 0.0
          %663 = vmatprep.subr.mxu0 0.0
          %664 = vmatpush1.msra.mxu0 0.0
          %665 = vmatprep.subr.mxu0 0.0
          %666 = vmatpush1.msra.mxu0 0.0
          %667 = vmatprep.subr.mxu0 0.0
          %668 = vmatpush1.msra.mxu0 0.0
          %669 = vmatprep.subr.mxu0 0.0
          %670 = vmatpush1.msra.mxu0 0.0
          %671 = vmatprep.subr.mxu0 0.0
          %672 = vmatpush1.msra.mxu0 0.0
          %673 = vmatprep.subr.mxu0 0.0
          %674 = vmatpush1.msra.mxu0 0.0
          %675 = vmatprep.subr.mxu0 0.0
          %676 = vmatpush1.msra.mxu0 0.0
          %677 = vmatprep.subr.mxu0 0.0
          %678 = vmatpush1.msra.mxu0 0.0
          %679 = vmatprep.subr.mxu0 0.0
          %680 = vmatpush1.msra.mxu0 %v647
          %681 = vmatprep.subr.mxu0 0.0
          %682 = vmatpush2.msra.mxu0 0.0
          %683 = vmatprep.subr.mxu0 0.0
          %684 = vmatpush2.msra.mxu0 0.0
          %685 = vmatprep.subr.mxu0 0.0
          %686 = vmatpush2.msra.mxu0 0.0
          %687 = vmatprep.subr.mxu0 0.0
          %688 = vmatpush2.msra.mxu0 0.0
          %689 = vmatprep.subr.mxu0 0.0
          %690 = vmatpush2.msra.mxu0 0.0
          %691 = vmatprep.subr.mxu0 0.0
          %692 = vmatpush2.msra.mxu0 0.0
          %693 = vmatprep.subr.mxu0 0.0
          %694 = vmatpush2.msra.mxu0 0.0
          %695 = vmatprep.subr.mxu0 0.0
          %696 = vmatpush2.msra.mxu0 0.0
          %697 = vmatprep.subr.mxu0 0.0
          %698 = vmatpush2.msra.mxu0 0.0
          %699 = vmatprep.subr.mxu0 0.0
          %700 = vmatpush2.msra.mxu0 0.0
          %701 = vmatprep.subr.mxu0 0.0
          %702 = vmatpush2.msra.mxu0 0.0
          %703 = vmatprep.subr.mxu0 0.0
          %704 = vmatpush2.msra.mxu0 0.0
          %705 = vmatprep.subr.mxu0 0.0
          %706 = vmatpush2.msra.mxu0 0.0
          %707 = vmatprep.subr.mxu0 0.0
          %708 = vmatpush2.msra.mxu0 0.0
          %709 = vmatprep.subr.mxu0 0.0
          %710 = vmatpush2.msra.mxu0 0.0
          %711 = vmatprep.subr.mxu0 0.0
          %712 = vmatpush2.msra.mxu0 0.0
          %713 = vmatprep.mubr.f32.mxu0 0.0
          %714 = vmatmul.mubr.f32.gmra.mxu0 %v644
          %v715 = vpop.f32.mrf.mxu0
          %v716 = vadd.f32 0.0, %v715
          %v717 = vpop.f32.mrf.mxu0
          %718 = vdwg.mxu0
          %v719 = vadd.f32 %v636, %v716
          %v720 = vld [vmem:[%s6] sm:$0x1]
          %v722 = vlaneseq
          %v723 = vshrl.u32 %v722, 7
          %v724 = vsub.s32 0, %v723
          %v725 = vrot.slane %v720, %v724
          %v727 = vadd.f32 %v719, %v725
          %vm728 = vcmp.gt.f32.partialorder %v727, 0.0
          %v729 = vmul.f32 %v727, 0.1
          %v730 = vsel %vm728, %v727, %v729
          %v731 = vld [vmem:[%s7] sm:$0xff]
          %v732 = vld [vmem:[%s7 + $0x8] sm:$0x3]
          %v733 = vld [vmem:[%s8] sm:$0x1]
          %v735 = vlaneseq
          %v736 = vshrl.u32 %v735, 7
          %v737 = vsub.s32 0, %v736
          %v738 = vrot.slane %v733, %v737
          %v741 = vsel %vm485, %v730, 0
          %v744 = vsel %vm489, %v732, 0
          %746 = vmatprep.subr.mxu0 0.0
          %747 = vmatpush1.msra.mxu0 0.0
          %748 = vmatprep.subr.mxu0 0.0
          %749 = vmatpush1.msra.mxu0 0.0
          %750 = vmatprep.subr.mxu0 0.0
          %751 = vmatpush1.msra.mxu0 0.0
          %752 = vmatprep.subr.mxu0 0.0
          %753 = vmatpush1.msra.mxu0 0.0
          %754 = vmatprep.subr.mxu0 0.0
          %755 = vmatpush1.msra.mxu0 0.0
          %756 = vmatprep.subr.mxu0 0.0
          %757 = vmatpush1.msra.mxu0 0.0
          %758 = vmatprep.subr.mxu0 0.0
          %759 = vmatpush1.msra.mxu0 0.0
          %760 = vmatprep.subr.mxu0 0.0
          %761 = vmatpush1.msra.mxu0 0.0
          %762 = vmatprep.subr.mxu0 0.0
          %763 = vmatpush1.msra.mxu0 0.0
          %764 = vmatprep.subr.mxu0 0.0
          %765 = vmatpush1.msra.mxu0 0.0
          %766 = vmatprep.subr.mxu0 0.0
          %767 = vmatpush1.msra.mxu0 0.0
          %768 = vmatprep.subr.mxu0 0.0
          %769 = vmatpush1.msra.mxu0 0.0
          %770 = vmatprep.subr.mxu0 0.0
          %771 = vmatpush1.msra.mxu0 0.0
          %772 = vmatprep.subr.mxu0 0.0
          %773 = vmatpush1.msra.mxu0 0.0
          %774 = vmatprep.subr.mxu0 0.0
          %775 = vmatpush1.msra.mxu0 %v744
          %776 = vmatprep.subr.mxu0 0.0
          %777 = vmatpush1.msra.mxu0 %v731
          %778 = vmatprep.subr.mxu0 0.0
          %779 = vmatpush2.msra.mxu0 0.0
          %780 = vmatprep.subr.mxu0 0.0
          %781 = vmatpush2.msra.mxu0 0.0
          %782 = vmatprep.subr.mxu0 0.0
          %783 = vmatpush2.msra.mxu0 0.0
          %784 = vmatprep.subr.mxu0 0.0
          %785 = vmatpush2.msra.mxu0 0.0
          %786 = vmatprep.subr.mxu0 0.0
          %787 = vmatpush2.msra.mxu0 0.0
          %788 = vmatprep.subr.mxu0 0.0
          %789 = vmatpush2.msra.mxu0 0.0
          %790 = vmatprep.subr.mxu0 0.0
          %791 = vmatpush2.msra.mxu0 0.0
          %792 = vmatprep.subr.mxu0 0.0
          %793 = vmatpush2.msra.mxu0 0.0
          %794 = vmatprep.subr.mxu0 0.0
          %795 = vmatpush2.msra.mxu0 0.0
          %796 = vmatprep.subr.mxu0 0.0
          %797 = vmatpush2.msra.mxu0 0.0
          %798 = vmatprep.subr.mxu0 0.0
          %799 = vmatpush2.msra.mxu0 0.0
          %800 = vmatprep.subr.mxu0 0.0
          %801 = vmatpush2.msra.mxu0 0.0
          %802 = vmatprep.subr.mxu0 0.0
          %803 = vmatpush2.msra.mxu0 0.0
          %804 = vmatprep.subr.mxu0 0.0
          %805 = vmatpush2.msra.mxu0 0.0
          %806 = vmatprep.subr.mxu0 0.0
          %807 = vmatpush2.msra.mxu0 0.0
          %808 = vmatprep.subr.mxu0 0.0
          %809 = vmatpush2.msra.mxu0 0.0
          %810 = vmatprep.mubr.f32.mxu0 0.0
          %811 = vmatmul.mubr.f32.gmra.mxu0 %v741
          %v812 = vpop.f32.mrf.mxu0
          %v813 = vadd.f32 %v738, %v812
          %v814 = vpop.f32.mrf.mxu0
          %815 = vdwg.mxu0
          %vm816 = vcmask 74752
          %817 = vst.msk [vmem:[#allocation4] sm:$0x3] %vm816, %v813
        $region102: #{global_model_forward.1} parent=89 // pred_fallthru
          _
        // Predicated region
        $region103: #{global_model_forward.1} parent=89 // pred_check
          %p818 = pneg %p233
        $region104: #{global_model_forward.1} parent=89 // pred_check_branch
          %820 = sbr.rel (%p818) target = $region106
        $region105: #{global_model_forward.1} parent=89 // pred_region
          %s822 = ssub.s32 32, 32
          %823 = vsyncadd [#allocation5], %s822
          %s825 = sshll.u32 [#allocation4], 4
          %s826 = int_to_ptr.vmem [resolvable:$true] %s825
          %828 = dma.vmem_to_hbm [thread:$0]  %s826, 32, %s9, [#allocation5]
        $region106: #{global_model_forward.1} parent=89 // pred_fallthru
          _
        // Predicated region
        $region107: #{global_model_forward.1} parent=89 // pred_check
          %p829 = pneg %p233
        $region108: #{global_model_forward.1} parent=89 // pred_check_branch
          %831 = sbr.rel (%p829) target = $region110
        $region109: #{global_model_forward.1} parent=89 // pred_region
          %832 = dma.done [#allocation5], 32
        $region110: #{global_model_forward.1} parent=89 // pred_fallthru
          _
      $region90: #{global_model_forward.1} parent=5 // pred_fallthru
        _
      %p833 = scmp.le.s32.totalorder 2, %s16
      // Predicated region
      $region111: #{global_model_forward.1} parent=5 // pred_check
        %p834 = pneg %p833
      $region112: #{global_model_forward.1} parent=5 // pred_check_branch
        %836 = sbr.rel (%p834) target = $region114
      $region113: #{global_model_forward.1} parent=5 // pred_region
        %s837 = ssub.s32 %s16, 2
      $region114: #{global_model_forward.1} parent=5 // pred_fallthru
        _
    $region6: #{global_model_forward.1} parent=1 // loop_footer
      %s20 = sadd.s32 1, %s16
    $region7: #{global_model_forward.1} parent=1 // loop_footer_branch
      %15 = sbr.rel target = $region3
    $region8: #{global_model_forward.1} parent=1 // loop_exit
      _
    %838 = vsyncpa [#allocation5], 1
    %s839 = scalar_lea.sflag [#allocation5], 1
    %840 = vsyncpa %s839, 1

</llo_original>
